<compile_context>
chip_gen: v5e
topology: v5e:2x2
jax: 0.10.0
libtpu: 0.0.40
codegen_flags: <defaults>
</compile_context>

<pallas_src>
import jax
import jax.numpy as jnp
from jax.experimental import pallas as pl
from jax.experimental.pallas import tpu as pltpu


def _cdiv(a, b):
    return -(-a // b)


# ---------------------------------------------------------------------------
# Kernel 1: downsample is None  ->  out = x0 + x1  (memory-bound elementwise)
# ---------------------------------------------------------------------------
def _add_kernel(a_ref, b_ref, o_ref):
    o_ref[...] = a_ref[...] + b_ref[...]


def residual_no_downsample(x0, x1, *, lanes=512, tm_target=1024):
    """x0, x1: NCHW (any shape), same shape/dtype."""
    assert x0.shape == x1.shape and x0.dtype == x1.dtype
    orig_shape = x0.shape
    total = x0.size

    # Flatten -> pad -> (rows, lanes): wide lane-dense blocks, unmasked stores.
    rows = _cdiv(total, lanes)
    tm = min(tm_target, rows)                 # tm*lanes*4B <= 2 MiB (f32)
    rows_padded = _cdiv(rows, tm) * tm
    padded_total = rows_padded * lanes

    a = jnp.pad(x0.reshape(-1), (0, padded_total - total)).reshape(rows_padded, lanes)
    b = jnp.pad(x1.reshape(-1), (0, padded_total - total)).reshape(rows_padded, lanes)

    out = pl.pallas_call(
        _add_kernel,
        out_shape=jax.ShapeDtypeStruct((rows_padded, lanes), x0.dtype),
        grid_spec=pltpu.PrefetchScalarGridSpec(
            num_scalar_prefetch=0,
            grid=(rows_padded // tm,),
            in_specs=[
                pl.BlockSpec((tm, lanes), lambda i: (i, 0)),
                pl.BlockSpec((tm, lanes), lambda i: (i, 0)),
            ],
            out_specs=pl.BlockSpec((tm, lanes), lambda i: (i, 0)),
        ),
        compiler_params=pltpu.CompilerParams(
            dimension_semantics=("parallel",)),
    )(a, b)
    return out.reshape(-1)[:total].reshape(orig_shape)


# ---------------------------------------------------------------------------
# Kernel 2: downsample = AvgPool2d(2) -> Conv2d(Cin,Cout,1,bias=False) -> BN,
#           fully folded into one matmul + shift + residual add.
# ---------------------------------------------------------------------------
def _ds_residual_kernel(x1_ref, w_ref, shift_ref, x0_ref, o_ref):
    # x1_ref   : (tm, 4*C_in)  pooling-window-flattened activations
    # w_ref    : (4*C_in, tn)  1x1-conv weight with avgpool(0.25) + BN scale folded in
    # shift_ref: (1, tn)       beta - running_mean * scale   (f32)
    # x0_ref   : (tm, tn)      the other residual branch
    y = jnp.dot(x1_ref[...], w_ref[...], preferred_element_type=jnp.float32)
    o_ref[...] = (x0_ref[...].astype(jnp.float32) + y
                  + shift_ref[...]).astype(o_ref.dtype)


def residual_with_downsample(x0, x1, conv_w, gamma, beta, run_mean, run_var,
                             eps=1e-5, stride=2, tm_target=256, tn_max=512,
                             matmul_dtype=None):
    """
    x0 : (N, C_out, Ho, Wo)  NCHW   (already-processed branch)
    x1 : (N, C_in,  H,  W )  NCHW   (goes through downsample)
    conv_w : (C_out, C_in, 1, 1)    PyTorch Conv2d weight layout
    matmul_dtype: e.g. jnp.bfloat16 to feed the MXU bf16 operands (f32 accum).
    """
    N, C_in, H, W = x1.shape
    C_out = conv_w.shape[0]
    assert stride == 2 and H % 2 == 0 and W % 2 == 0
    Ho, Wo = H // 2, W // 2
    assert x0.shape == (N, C_out, Ho, Wo)
    rows = N * Ho * Wo
    K = 4 * C_in

    # ---- host-side one-time folds ------------------------------------------
    scale = gamma / jnp.sqrt(run_var + eps)                       # (C_out,)
    shift = (beta - run_mean * scale).reshape(1, C_out)           # (1, C_out)
    w = jnp.transpose(conv_w.reshape(C_out, C_in), (1, 0))        # (C_in, C_out)
    w = w * scale[None, :]                                        # fold BN scale
    w4 = jnp.tile(w, (4, 1)) * 0.25                               # fold 2x2 avgpool -> (K, C_out)

    # ---- layout plumbing: NCHW -> lane-dense 2D -----------------------------
    # TODO(synk): keep activations NHWC through the model; these transposes are
    # full extra HBM round-trips and dominate wall clock at real CLIP sizes.
    x1p = x1.reshape(N, C_in, Ho, 2, Wo, 2)
    x1p = jnp.transpose(x1p, (0, 2, 4, 3, 5, 1)).reshape(rows, K)  # window-major, channel-minor
    x0f = jnp.transpose(x0, (0, 2, 3, 1)).reshape(rows, C_out)

    if matmul_dtype is not None:
        x1p = x1p.astype(matmul_dtype)
        w4 = w4.astype(matmul_dtype)

    # ---- tiling --------------------------------------------------------------
    tm = min(tm_target, rows)
    rows_padded = _cdiv(rows, tm) * tm
    if rows_padded != rows:
        x1p = jnp.pad(x1p, ((0, rows_padded - rows), (0, 0)))
        x0f = jnp.pad(x0f, ((0, rows_padded - rows), (0, 0)))
    tn = C_out if C_out <= tn_max else tn_max
    assert C_out % tn == 0, "C_out must be a multiple of tn (CLIP C_out is)"

    out = pl.pallas_call(
        _ds_residual_kernel,
        out_shape=jax.ShapeDtypeStruct((rows_padded, C_out), x0.dtype),
        grid_spec=pltpu.PrefetchScalarGridSpec(
            num_scalar_prefetch=0,
            grid=(rows_padded // tm, C_out // tn),
            in_specs=[
                pl.BlockSpec((tm, K), lambda i, j: (i, 0)),
                pl.BlockSpec((K, tn), lambda i, j: (0, j)),
                pl.BlockSpec((1, tn), lambda i, j: (0, j)),
                pl.BlockSpec((tm, tn), lambda i, j: (i, j)),
            ],
            out_specs=pl.BlockSpec((tm, tn), lambda i, j: (i, j)),
        ),
        compiler_params=pltpu.CompilerParams(
            dimension_semantics=("parallel", "parallel")),
    )(x1p, w4, shift, x0f)

    out = out[:rows]
    # back to NCHW for parity with the PyTorch module
    return jnp.transpose(out.reshape(N, Ho, Wo, C_out), (0, 3, 1, 2))


# ---------------------------------------------------------------------------
# Pure-JAX reference (sanity check)
# ---------------------------------------------------------------------------
def _ref_with_downsample(x0, x1, conv_w, gamma, beta, rm, rv, eps=1e-5):
    N, C_in, H, W = x1.shape
    C_out = conv_w.shape[0]
    pooled = x1.reshape(N, C_in, H // 2, 2, W // 2, 2).mean(axis=(3, 5))
    y = jnp.einsum('nchw,oc->nohw', pooled, conv_w.reshape(C_out, C_in))
    y = (y - rm[None, :, None, None]) / jnp.sqrt(rv + eps)[None, :, None, None]
    y = y * gamma[None, :, None, None] + beta[None, :, None, None]
    return x0 + y


if __name__ == "__main__":
    key = jax.random.PRNGKey(0)
    k0, k1, k2, k3, k4, k5, k6, k7 = jax.random.split(key, 8)

    # Small shapes consistent with a CLIP bottleneck downsample branch
    # (C_out kept a multiple of 128 so the output is lane-dense).
    N, C_in, H, W = 2, 64, 16, 16
    stride = 2
    C_out = 128
    Ho, Wo = H // stride, W // stride

    x1 = jax.random.normal(k0, (N, C_in, H, W), jnp.float32)          # NCHW
    x0 = jax.random.normal(k1, (N, C_out, Ho, Wo), jnp.float32)       # NCHW

    # Deterministic synthetic parameters (Conv2d 1x1 no-bias + BatchNorm2d eval).
    conv_w = 0.05 * jax.random.normal(k2, (C_out, C_in, 1, 1), jnp.float32)
    gamma = 1.0 + 0.1 * jax.random.normal(k3, (C_out,), jnp.float32)
    beta = 0.1 * jax.random.normal(k4, (C_out,), jnp.float32)
    run_mean = 0.1 * jax.random.normal(k5, (C_out,), jnp.float32)
    run_var = jnp.abs(1.0 + 0.1 * jax.random.normal(k6, (C_out,), jnp.float32))

    # Case 1: downsample present (AvgPool -> 1x1 Conv -> BN), fused kernel.
    out_ds = residual_with_downsample(
        x0, x1, conv_w, gamma, beta, run_mean, run_var)
    out_ds = jax.block_until_ready(out_ds)
    ref_ds = _ref_with_downsample(
        x0, x1, conv_w, gamma, beta, run_mean, run_var)
    assert out_ds.shape == (N, C_out, Ho, Wo)
    assert jnp.allclose(out_ds, ref_ds, atol=1e-3, rtol=1e-3)

    # Case 2: downsample is None -> plain residual add kernel.
    x1_same = jax.random.normal(k7, (N, C_out, Ho, Wo), jnp.float32)
    out_add = jax.block_until_ready(residual_no_downsample(x0, x1_same))
    assert jnp.allclose(out_add, x0 + x1_same, atol=1e-6)

    print("KERNEL_OK")
</pallas_src>

<mosaic_0001>
module attributes {stable_mosaic.version = 11 : i64} {
  func.func @_ds_residual_kernel(%arg0: i32, %arg1: i32, %arg2: memref<128x256xf32, #tpu.memory_space<vmem>>, %arg3: memref<256x128xf32, #tpu.memory_space<vmem>>, %arg4: memref<1x128xf32, #tpu.memory_space<vmem>>, %arg5: memref<128x128xf32, #tpu.memory_space<vmem>>, %arg6: memref<128x128xf32, #tpu.memory_space<vmem>>) attributes {dimension_semantics = [#tpu.dimension_semantics<parallel>, #tpu.dimension_semantics<parallel>], iteration_bounds = array<i64: 1, 1>, scalar_prefetch = 0 : i64, scratch_operands = 0 : i64, tpu.core_type = #tpu.core_type<tc>, window_params = [{transform_indices = @transform_0, window_bounds = array<i64: 128, 256>}, {transform_indices = @transform_1, window_bounds = array<i64: 256, 128>}, {transform_indices = @transform_2, window_bounds = array<i64: 1, 128>}, {transform_indices = @transform_3, window_bounds = array<i64: 128, 128>}, {transform_indices = @transform_4, window_bounds = array<i64: 128, 128>}]} {
    %c0 = arith.constant 0 : index
    %c0_0 = arith.constant 0 : index
    %0 = vector.load %arg2[%c0, %c0_0] : memref<128x256xf32, #tpu.memory_space<vmem>>, vector<128x256xf32>
    %c0_1 = arith.constant 0 : index
    %c0_2 = arith.constant 0 : index
    %1 = vector.load %arg3[%c0_1, %c0_2] : memref<256x128xf32, #tpu.memory_space<vmem>>, vector<256x128xf32>
    %cst = arith.constant dense<0.000000e+00> : vector<128x128xf32>
    %2 = tpu.matmul %0, %1, %cst {dimension_numbers = #tpu.dot_dimension_numbers<[1], [0], [0], [1], [0, 0, 1, 1], [], []>} : vector<128x256xf32>, vector<256x128xf32>, vector<128x128xf32> -> vector<128x128xf32>
    %c0_3 = arith.constant 0 : index
    %c0_4 = arith.constant 0 : index
    %3 = vector.load %arg5[%c0_3, %c0_4] : memref<128x128xf32, #tpu.memory_space<vmem>>, vector<128x128xf32>
    %4 = arith.addf %3, %2 : vector<128x128xf32>
    %c0_5 = arith.constant 0 : index
    %c0_6 = arith.constant 0 : index
    %5 = vector.load %arg4[%c0_5, %c0_6] : memref<1x128xf32, #tpu.memory_space<vmem>>, vector<1x128xf32>
    %6 = vector.broadcast %5 : vector<1x128xf32> to vector<128x128xf32>
    %7 = arith.addf %4, %6 : vector<128x128xf32>
    %c0_7 = arith.constant 0 : index
    %c0_8 = arith.constant 0 : index
    %8 = vector.load %arg6[%c0_7, %c0_8] : memref<128x128xf32, #tpu.memory_space<vmem>>, vector<128x128xf32>
    tpu.vector_store %arg6[%c0_7, %c0_8], %7 {strides = array<i32>} : memref<128x128xf32, #tpu.memory_space<vmem>>, vector<128x128xf32>,
    return
  }
  func.func @transform_0(%arg0: i32, %arg1: i32) -> (i32, i32) {
    %c0_i32 = arith.constant 0 : i32
    %c0_i32_0 = arith.constant 0 : i32
    return %arg0, %c0_i32 : i32, i32
  }
  func.func @transform_1(%arg0: i32, %arg1: i32) -> (i32, i32) {
    %c0_i32 = arith.constant 0 : i32
    %c0_i32_0 = arith.constant 0 : i32
    return %c0_i32, %arg1 : i32, i32
  }
  func.func @transform_2(%arg0: i32, %arg1: i32) -> (i32, i32) {
    %c0_i32 = arith.constant 0 : i32
    %c0_i32_0 = arith.constant 0 : i32
    return %c0_i32, %arg1 : i32, i32
  }
  func.func @transform_3(%arg0: i32, %arg1: i32) -> (i32, i32) {
    %c0_i32 = arith.constant 0 : i32
    return %arg0, %arg1 : i32, i32
  }
  func.func @transform_4(%arg0: i32, %arg1: i32) -> (i32, i32) {
    %c0_i32 = arith.constant 0 : i32
    return %arg0, %arg1 : i32, i32
  }
}

</mosaic_0001>

<llo_original>
// kernel: tpu_custom_call.1
$region0: #{tpu_custom_call.1}
  #allocation0 [shape = 'u32[]', space=smem, size = 0x4, offset = 0x4, fixed_abs, tag = 'smem constant byte address 0x4 - core index']
  #allocation1 [shape = 'u32[72,128]{1,0:T(1,128)}', space=vmem, size = 0x9000, scoped, tag = 'internal scratch']
  %s0 = inlined_call_operand.hbm [shape: f32[128,256], index: 0, kind: input, shape index: {}]
  %s1 = inlined_call_operand.hbm [shape: f32[256,128], index: 1, kind: input, shape index: {}]
  %s2 = inlined_call_operand.vmem [shape: f32[1,128], index: 2, kind: input, shape index: {}]
  %s3 = inlined_call_operand.hbm [shape: f32[128,128], index: 3, kind: input, shape index: {}]
  %s4 = inlined_call_operand.hbm [shape: f32[128,128], index: 4, kind: output, shape index: {}]
  %s5 = sld [smem:[#allocation0]]
  $region38: #{tpu_custom_call.1} parent=0
    _
  %s7 = ssub.s32 1, %s5
  %s8 = scalar_select 0, %s7, %s5
  $region1: #{tpu_custom_call.1} parent=0
    #allocation2 [shape = 'u8[131072]{0}', space=vmem, size = 0x20000, scoped, tag = 'input window, operand 0, single buffered']
    #allocation3 [shape = 's32[1]{0}', space=sflag, size = 0x4, scoped, tag = 'scoped memory for tpu_custom_call.1']
    #allocation4 [shape = 's32[1]{0}', space=sflag, size = 0x4, scoped, tag = 'scoped memory for tpu_custom_call.1']
    #allocation5 [shape = 'u8[131072]{0}', space=vmem, size = 0x20000, scoped, tag = 'input window, operand 1, single buffered']
    #allocation6 [shape = 's32[1]{0}', space=sflag, size = 0x4, scoped, tag = 'scoped memory for tpu_custom_call.1']
    #allocation7 [shape = 'u8[65536]{0}', space=vmem, size = 0x10000, scoped, tag = 'input window, operand 3, single buffered']
    #allocation8 [shape = 'u8[65536]{0}', space=vmem, size = 0x10000, scoped, tag = 'output window, operand 0, single buffered']
    %9 = vsyncpa [#allocation3], 0
    %10 = vsyncpa [#allocation6], 0
    %11 = vsyncpa [#allocation4], 0
    // Predicated region
    $region2: #{tpu_custom_call.1} parent=1 // pred_check
      _
    $region3: #{tpu_custom_call.1} parent=1 // pred_check_branch
      %13 = sbr.rel (0) target = $region5
    $region4: #{tpu_custom_call.1} parent=1 // pred_region
      %15 = vsyncadd [#allocation3], 0
      %s16 = sshll.u32 %s0, 4
      %s17 = int_to_ptr.hbm [resolvable:$true] %s16
      %s18 = sshll.u32 [#allocation2], 4
      %s19 = int_to_ptr.vmem [resolvable:$true] %s18
      %24 = dma.hbm_to_vmem [thread:$0]  %s17, 4096, %s19, [#allocation3], 256, 256, 16
    $region5: #{tpu_custom_call.1} parent=1 // pred_fallthru
      _
    // Predicated region
    $region6: #{tpu_custom_call.1} parent=1 // pred_check
      _
    $region7: #{tpu_custom_call.1} parent=1 // pred_check_branch
      %26 = sbr.rel (0) target = $region9
    $region8: #{tpu_custom_call.1} parent=1 // pred_region
      %28 = vsyncadd [#allocation6], 0
      %s29 = sshll.u32 %s1, 4
      %s30 = int_to_ptr.hbm [resolvable:$true] %s29
      %s31 = sshll.u32 [#allocation5], 4
      %s32 = int_to_ptr.vmem [resolvable:$true] %s31
      %37 = dma.hbm_to_vmem [thread:$0]  %s30, 4096, %s32, [#allocation6], 128, 128, 8
    $region9: #{tpu_custom_call.1} parent=1 // pred_fallthru
      _
    // Predicated region
    $region10: #{tpu_custom_call.1} parent=1 // pred_check
      _
    $region11: #{tpu_custom_call.1} parent=1 // pred_check_branch
      %39 = sbr.rel (0) target = $region13
    $region12: #{tpu_custom_call.1} parent=1 // pred_region
      _
    $region13: #{tpu_custom_call.1} parent=1 // pred_fallthru
      _
    // Predicated region
    $region14: #{tpu_custom_call.1} parent=1 // pred_check
      _
    $region15: #{tpu_custom_call.1} parent=1 // pred_check_branch
      %41 = sbr.rel (0) target = $region17
    $region16: #{tpu_custom_call.1} parent=1 // pred_region
      %43 = vsyncadd [#allocation6], 0
      %s44 = sshll.u32 %s3, 4
      %s45 = int_to_ptr.hbm [resolvable:$true] %s44
      %s46 = sshll.u32 [#allocation7], 4
      %s47 = int_to_ptr.vmem [resolvable:$true] %s46
      %52 = dma.hbm_to_vmem [thread:$0]  %s45, 2048, %s47, [#allocation6], 128, 128, 8
    $region17: #{tpu_custom_call.1} parent=1 // pred_fallthru
      _
    // Predicated region
    $region18: #{tpu_custom_call.1} parent=1 // pred_check
      _
    $region19: #{tpu_custom_call.1} parent=1 // pred_check_branch
      %54 = sbr.rel (0) target = $region21
    $region20: #{tpu_custom_call.1} parent=1 // pred_region
      %56 = dma.done [#allocation3], 4096
    $region21: #{tpu_custom_call.1} parent=1 // pred_fallthru
      _
    // Predicated region
    $region22: #{tpu_custom_call.1} parent=1 // pred_check
      _
    $region23: #{tpu_custom_call.1} parent=1 // pred_check_branch
      %58 = sbr.rel (0) target = $region25
    $region24: #{tpu_custom_call.1} parent=1 // pred_region
      %60 = dma.done [#allocation6], 4096
    $region25: #{tpu_custom_call.1} parent=1 // pred_fallthru
      _
    // Predicated region
    $region26: #{tpu_custom_call.1} parent=1 // pred_check
      _
    $region27: #{tpu_custom_call.1} parent=1 // pred_check_branch
      %62 = sbr.rel (0) target = $region29
    $region28: #{tpu_custom_call.1} parent=1 // pred_region
      %64 = dma.done [#allocation6], 2048
    $region29: #{tpu_custom_call.1} parent=1 // pred_fallthru
      _
    %v65 = vld [vmem:[#allocation2] sm:$0xff]
    %v66 = vld [vmem:[#allocation2 + $0x8] sm:$0xff]
    %v67 = vld [vmem:[#allocation2 + $0x10] sm:$0xff]
    %v68 = vld [vmem:[#allocation2 + $0x18] sm:$0xff]
    %v69 = vld [vmem:[#allocation2 + $0x20] sm:$0xff]
    %v70 = vld [vmem:[#allocation2 + $0x28] sm:$0xff]
    %v71 = vld [vmem:[#allocation2 + $0x30] sm:$0xff]
    %v72 = vld [vmem:[#allocation2 + $0x38] sm:$0xff]
    %v73 = vld [vmem:[#allocation2 + $0x40] sm:$0xff]
    %v74 = vld [vmem:[#allocation2 + $0x48] sm:$0xff]
    %v75 = vld [vmem:[#allocation2 + $0x50] sm:$0xff]
    %v76 = vld [vmem:[#allocation2 + $0x58] sm:$0xff]
    %v77 = vld [vmem:[#allocation2 + $0x60] sm:$0xff]
    %v78 = vld [vmem:[#allocation2 + $0x68] sm:$0xff]
    %v79 = vld [vmem:[#allocation2 + $0x70] sm:$0xff]
    %v80 = vld [vmem:[#allocation2 + $0x78] sm:$0xff]
    %v81 = vld [vmem:[#allocation2 + $0x80] sm:$0xff]
    %v82 = vld [vmem:[#allocation2 + $0x88] sm:$0xff]
    %v83 = vld [vmem:[#allocation2 + $0x90] sm:$0xff]
    %v84 = vld [vmem:[#allocation2 + $0x98] sm:$0xff]
    %v85 = vld [vmem:[#allocation2 + $0xa0] sm:$0xff]
    %v86 = vld [vmem:[#allocation2 + $0xa8] sm:$0xff]
    %v87 = vld [vmem:[#allocation2 + $0xb0] sm:$0xff]
    %v88 = vld [vmem:[#allocation2 + $0xb8] sm:$0xff]
    %v89 = vld [vmem:[#allocation2 + $0xc0] sm:$0xff]
    %v90 = vld [vmem:[#allocation2 + $0xc8] sm:$0xff]
    %v91 = vld [vmem:[#allocation2 + $0xd0] sm:$0xff]
    %v92 = vld [vmem:[#allocation2 + $0xd8] sm:$0xff]
    %v93 = vld [vmem:[#allocation2 + $0xe0] sm:$0xff]
    %v94 = vld [vmem:[#allocation2 + $0xe8] sm:$0xff]
    %v95 = vld [vmem:[#allocation2 + $0xf0] sm:$0xff]
    %v96 = vld [vmem:[#allocation2 + $0xf8] sm:$0xff]
    %v97 = vld [vmem:[#allocation5] sm:$0xff]
    %v98 = vld [vmem:[#allocation5 + $0x8] sm:$0xff]
    %v99 = vld [vmem:[#allocation5 + $0x10] sm:$0xff]
    %v100 = vld [vmem:[#allocation5 + $0x18] sm:$0xff]
    %v101 = vld [vmem:[#allocation5 + $0x20] sm:$0xff]
    %v102 = vld [vmem:[#allocation5 + $0x28] sm:$0xff]
    %v103 = vld [vmem:[#allocation5 + $0x30] sm:$0xff]
    %v104 = vld [vmem:[#allocation5 + $0x38] sm:$0xff]
    %v105 = vld [vmem:[#allocation5 + $0x40] sm:$0xff]
    %v106 = vld [vmem:[#allocation5 + $0x48] sm:$0xff]
    %v107 = vld [vmem:[#allocation5 + $0x50] sm:$0xff]
    %v108 = vld [vmem:[#allocation5 + $0x58] sm:$0xff]
    %v109 = vld [vmem:[#allocation5 + $0x60] sm:$0xff]
    %v110 = vld [vmem:[#allocation5 + $0x68] sm:$0xff]
    %v111 = vld [vmem:[#allocation5 + $0x70] sm:$0xff]
    %v112 = vld [vmem:[#allocation5 + $0x78] sm:$0xff]
    %v113 = vld [vmem:[#allocation5 + $0x80] sm:$0xff]
    %v114 = vld [vmem:[#allocation5 + $0x88] sm:$0xff]
    %v115 = vld [vmem:[#allocation5 + $0x90] sm:$0xff]
    %v116 = vld [vmem:[#allocation5 + $0x98] sm:$0xff]
    %v117 = vld [vmem:[#allocation5 + $0xa0] sm:$0xff]
    %v118 = vld [vmem:[#allocation5 + $0xa8] sm:$0xff]
    %v119 = vld [vmem:[#allocation5 + $0xb0] sm:$0xff]
    %v120 = vld [vmem:[#allocation5 + $0xb8] sm:$0xff]
    %v121 = vld [vmem:[#allocation5 + $0xc0] sm:$0xff]
    %v122 = vld [vmem:[#allocation5 + $0xc8] sm:$0xff]
    %v123 = vld [vmem:[#allocation5 + $0xd0] sm:$0xff]
    %v124 = vld [vmem:[#allocation5 + $0xd8] sm:$0xff]
    %v125 = vld [vmem:[#allocation5 + $0xe0] sm:$0xff]
    %v126 = vld [vmem:[#allocation5 + $0xe8] sm:$0xff]
    %v127 = vld [vmem:[#allocation5 + $0xf0] sm:$0xff]
    %v128 = vld [vmem:[#allocation5 + $0xf8] sm:$0xff]
    %129 = vmatpush.msra.mxu0 %v112
    %130 = vmatpush.msra.mxu0 %v111
    %131 = vmatpush.msra.mxu0 %v110
    %132 = vmatpush.msra.mxu0 %v109
    %133 = vmatpush.msra.mxu0 %v108
    %134 = vmatpush.msra.mxu0 %v107
    %135 = vmatpush.msra.mxu0 %v106
    %136 = vmatpush.msra.mxu0 %v105
    %137 = vmatpush.msra.mxu0 %v104
    %138 = vmatpush.msra.mxu0 %v103
    %139 = vmatpush.msra.mxu0 %v102
    %140 = vmatpush.msra.mxu0 %v101
    %141 = vmatpush.msra.mxu0 %v100
    %142 = vmatpush.msra.mxu0 %v99
    %143 = vmatpush.msra.mxu0 %v98
    %144 = vmatpush.msra.mxu0 %v97
    %145 = vmatmul.f32.gmra.mxu0 %v65
    %v146 = vpop.f32.mrf.mxu0
    %v147 = vadd.f32 0.0, %v146
    %148 = vmatmul.f32.gmra.mxu0 %v67
    %v149 = vpop.f32.mrf.mxu0
    %v150 = vadd.f32 0.0, %v149
    %151 = vmatmul.f32.gmra.mxu0 %v69
    %v152 = vpop.f32.mrf.mxu0
    %v153 = vadd.f32 0.0, %v152
    %154 = vmatmul.f32.gmra.mxu0 %v71
    %v155 = vpop.f32.mrf.mxu0
    %v156 = vadd.f32 0.0, %v155
    %157 = vmatmul.f32.gmra.mxu0 %v73
    %v158 = vpop.f32.mrf.mxu0
    %v159 = vadd.f32 0.0, %v158
    %160 = vmatmul.f32.gmra.mxu0 %v75
    %v161 = vpop.f32.mrf.mxu0
    %v162 = vadd.f32 0.0, %v161
    %163 = vmatmul.f32.gmra.mxu0 %v77
    %v164 = vpop.f32.mrf.mxu0
    %v165 = vadd.f32 0.0, %v164
    %166 = vmatmul.f32.gmra.mxu0 %v79
    %v167 = vpop.f32.mrf.mxu0
    %v168 = vadd.f32 0.0, %v167
    %169 = vmatmul.f32.gmra.mxu0 %v81
    %v170 = vpop.f32.mrf.mxu0
    %v171 = vadd.f32 0.0, %v170
    %172 = vmatmul.f32.gmra.mxu0 %v83
    %v173 = vpop.f32.mrf.mxu0
    %v174 = vadd.f32 0.0, %v173
    %175 = vmatmul.f32.gmra.mxu0 %v85
    %v176 = vpop.f32.mrf.mxu0
    %v177 = vadd.f32 0.0, %v176
    %178 = vmatmul.f32.gmra.mxu0 %v87
    %v179 = vpop.f32.mrf.mxu0
    %v180 = vadd.f32 0.0, %v179
    %181 = vmatmul.f32.gmra.mxu0 %v89
    %v182 = vpop.f32.mrf.mxu0
    %v183 = vadd.f32 0.0, %v182
    %184 = vmatmul.f32.gmra.mxu0 %v91
    %v185 = vpop.f32.mrf.mxu0
    %v186 = vadd.f32 0.0, %v185
    %187 = vmatmul.f32.gmra.mxu0 %v93
    %v188 = vpop.f32.mrf.mxu0
    %v189 = vadd.f32 0.0, %v188
    %190 = vmatmul.f32.gmra.mxu0 %v95
    %v191 = vpop.f32.mrf.mxu0
    %v192 = vadd.f32 0.0, %v191
    %193 = vdwg.mxu0
    %194 = vmatpush.msra.mxu0 %v128
    %195 = vmatpush.msra.mxu0 %v127
    %196 = vmatpush.msra.mxu0 %v126
    %197 = vmatpush.msra.mxu0 %v125
    %198 = vmatpush.msra.mxu0 %v124
    %199 = vmatpush.msra.mxu0 %v123
    %200 = vmatpush.msra.mxu0 %v122
    %201 = vmatpush.msra.mxu0 %v121
    %202 = vmatpush.msra.mxu0 %v120
    %203 = vmatpush.msra.mxu0 %v119
    %204 = vmatpush.msra.mxu0 %v118
    %205 = vmatpush.msra.mxu0 %v117
    %206 = vmatpush.msra.mxu0 %v116
    %207 = vmatpush.msra.mxu0 %v115
    %208 = vmatpush.msra.mxu0 %v114
    %209 = vmatpush.msra.mxu0 %v113
    %210 = vmatmul.f32.gmra.mxu0 %v66
    %v211 = vpop.f32.mrf.mxu0
    %v212 = vadd.f32 %v147, %v211
    %213 = vmatmul.f32.gmra.mxu0 %v68
    %v214 = vpop.f32.mrf.mxu0
    %v215 = vadd.f32 %v150, %v214
    %216 = vmatmul.f32.gmra.mxu0 %v70
    %v217 = vpop.f32.mrf.mxu0
    %v218 = vadd.f32 %v153, %v217
    %219 = vmatmul.f32.gmra.mxu0 %v72
    %v220 = vpop.f32.mrf.mxu0
    %v221 = vadd.f32 %v156, %v220
    %222 = vmatmul.f32.gmra.mxu0 %v74
    %v223 = vpop.f32.mrf.mxu0
    %v224 = vadd.f32 %v159, %v223
    %225 = vmatmul.f32.gmra.mxu0 %v76
    %v226 = vpop.f32.mrf.mxu0
    %v227 = vadd.f32 %v162, %v226
    %228 = vmatmul.f32.gmra.mxu0 %v78
    %v229 = vpop.f32.mrf.mxu0
    %v230 = vadd.f32 %v165, %v229
    %231 = vmatmul.f32.gmra.mxu0 %v80
    %v232 = vpop.f32.mrf.mxu0
    %v233 = vadd.f32 %v168, %v232
    %234 = vmatmul.f32.gmra.mxu0 %v82
    %v235 = vpop.f32.mrf.mxu0
    %v236 = vadd.f32 %v171, %v235
    %237 = vmatmul.f32.gmra.mxu0 %v84
    %v238 = vpop.f32.mrf.mxu0
    %v239 = vadd.f32 %v174, %v238
    %240 = vmatmul.f32.gmra.mxu0 %v86
    %v241 = vpop.f32.mrf.mxu0
    %v242 = vadd.f32 %v177, %v241
    %243 = vmatmul.f32.gmra.mxu0 %v88
    %v244 = vpop.f32.mrf.mxu0
    %v245 = vadd.f32 %v180, %v244
    %246 = vmatmul.f32.gmra.mxu0 %v90
    %v247 = vpop.f32.mrf.mxu0
    %v248 = vadd.f32 %v183, %v247
    %249 = vmatmul.f32.gmra.mxu0 %v92
    %v250 = vpop.f32.mrf.mxu0
    %v251 = vadd.f32 %v186, %v250
    %252 = vmatmul.f32.gmra.mxu0 %v94
    %v253 = vpop.f32.mrf.mxu0
    %v254 = vadd.f32 %v189, %v253
    %255 = vmatmul.f32.gmra.mxu0 %v96
    %v256 = vpop.f32.mrf.mxu0
    %v257 = vadd.f32 %v192, %v256
    %258 = vdwg.mxu0
    %v259 = vld [vmem:[#allocation7] sm:$0xff]
    %v260 = vld [vmem:[#allocation7 + $0x8] sm:$0xff]
    %v261 = vld [vmem:[#allocation7 + $0x10] sm:$0xff]
    %v262 = vld [vmem:[#allocation7 + $0x18] sm:$0xff]
    %v263 = vld [vmem:[#allocation7 + $0x20] sm:$0xff]
    %v264 = vld [vmem:[#allocation7 + $0x28] sm:$0xff]
    %v265 = vld [vmem:[#allocation7 + $0x30] sm:$0xff]
    %v266 = vld [vmem:[#allocation7 + $0x38] sm:$0xff]
    %v267 = vld [vmem:[#allocation7 + $0x40] sm:$0xff]
    %v268 = vld [vmem:[#allocation7 + $0x48] sm:$0xff]
    %v269 = vld [vmem:[#allocation7 + $0x50] sm:$0xff]
    %v270 = vld [vmem:[#allocation7 + $0x58] sm:$0xff]
    %v271 = vld [vmem:[#allocation7 + $0x60] sm:$0xff]
    %v272 = vld [vmem:[#allocation7 + $0x68] sm:$0xff]
    %v273 = vld [vmem:[#allocation7 + $0x70] sm:$0xff]
    %v274 = vld [vmem:[#allocation7 + $0x78] sm:$0xff]
    %v275 = vadd.f32 %v259, %v212
    %v276 = vadd.f32 %v260, %v215
    %v277 = vadd.f32 %v261, %v218
    %v278 = vadd.f32 %v262, %v221
    %v279 = vadd.f32 %v263, %v224
    %v280 = vadd.f32 %v264, %v227
    %v281 = vadd.f32 %v265, %v230
    %v282 = vadd.f32 %v266, %v233
    %v283 = vadd.f32 %v267, %v236
    %v284 = vadd.f32 %v268, %v239
    %v285 = vadd.f32 %v269, %v242
    %v286 = vadd.f32 %v270, %v245
    %v287 = vadd.f32 %v271, %v248
    %v288 = vadd.f32 %v272, %v251
    %v289 = vadd.f32 %v273, %v254
    %v290 = vadd.f32 %v274, %v257
    %v291 = vld [vmem:[%s2] sm:$0x1]
    %v293 = vperm.slane %v291, 0
    %v295 = vadd.f32 %v275, %v293
    %v296 = vadd.f32 %v276, %v293
    %v297 = vadd.f32 %v277, %v293
    %v298 = vadd.f32 %v278, %v293
    %v299 = vadd.f32 %v279, %v293
    %v300 = vadd.f32 %v280, %v293
    %v301 = vadd.f32 %v281, %v293
    %v302 = vadd.f32 %v282, %v293
    %v303 = vadd.f32 %v283, %v293
    %v304 = vadd.f32 %v284, %v293
    %v305 = vadd.f32 %v285, %v293
    %v306 = vadd.f32 %v286, %v293
    %v307 = vadd.f32 %v287, %v293
    %v308 = vadd.f32 %v288, %v293
    %v309 = vadd.f32 %v289, %v293
    %v310 = vadd.f32 %v290, %v293
    %311 = vst [vmem:[#allocation8] sm:$0xff] %v295
    %312 = vst [vmem:[#allocation8 + $0x8] sm:$0xff] %v296
    %313 = vst [vmem:[#allocation8 + $0x10] sm:$0xff] %v297
    %314 = vst [vmem:[#allocation8 + $0x18] sm:$0xff] %v298
    %315 = vst [vmem:[#allocation8 + $0x20] sm:$0xff] %v299
    %316 = vst [vmem:[#allocation8 + $0x28] sm:$0xff] %v300
    %317 = vst [vmem:[#allocation8 + $0x30] sm:$0xff] %v301
    %318 = vst [vmem:[#allocation8 + $0x38] sm:$0xff] %v302
    %319 = vst [vmem:[#allocation8 + $0x40] sm:$0xff] %v303
    %320 = vst [vmem:[#allocation8 + $0x48] sm:$0xff] %v304
    %321 = vst [vmem:[#allocation8 + $0x50] sm:$0xff] %v305
    %322 = vst [vmem:[#allocation8 + $0x58] sm:$0xff] %v306
    %323 = vst [vmem:[#allocation8 + $0x60] sm:$0xff] %v307
    %324 = vst [vmem:[#allocation8 + $0x68] sm:$0xff] %v308
    %325 = vst [vmem:[#allocation8 + $0x70] sm:$0xff] %v309
    %326 = vst [vmem:[#allocation8 + $0x78] sm:$0xff] %v310
    // Predicated region
    $region30: #{tpu_custom_call.1} parent=1 // pred_check
      _
    $region31: #{tpu_custom_call.1} parent=1 // pred_check_branch
      %328 = sbr.rel (0) target = $region33
    $region32: #{tpu_custom_call.1} parent=1 // pred_region
      %330 = vsyncadd [#allocation4], 0
      %s331 = sshll.u32 [#allocation8], 4
      %s332 = int_to_ptr.vmem [resolvable:$true] %s331
      %s333 = sshll.u32 %s4, 4
      %s334 = int_to_ptr.hbm [resolvable:$true] %s333
      %339 = dma.vmem_to_hbm [thread:$0]  %s332, 2048, %s334, [#allocation4], 128, 128, 8
    $region33: #{tpu_custom_call.1} parent=1 // pred_fallthru
      _
    // Predicated region
    $region34: #{tpu_custom_call.1} parent=1 // pred_check
      _
    $region35: #{tpu_custom_call.1} parent=1 // pred_check_branch
      %341 = sbr.rel (0) target = $region37
    $region36: #{tpu_custom_call.1} parent=1 // pred_region
      %343 = dma.done [#allocation4], 2048
    $region37: #{tpu_custom_call.1} parent=1 // pred_fallthru
      _
    %344 = vsyncpa [#allocation3], 1
    %345 = vsyncpa [#allocation6], 1
    %346 = vsyncpa [#allocation4], 1

</llo_original>
